<compile_context>
chip_gen: v7x
topology: tpu7x:2x2x1
jax: 0.10.0
libtpu: 0.0.40
codegen_flags: <defaults>
</compile_context>

<pallas_src>
from functools import partial

import jax
import jax.numpy as jnp
from jax.experimental import pallas as pl
from jax.experimental.pallas import tpu as pltpu


_SUB = 16                    # sublane multiple safe for f32 and bf16 batch tiles
_VMEM_BUDGET = 40 << 20      # per-call working-set cap (inside v7x's 64 MiB VMEM)
_VMEM_LIMIT_CAP = 48 << 20   # explicit scoped-VMEM limit passed to Mosaic


def _round_up(x: int, m: int) -> int:
    return (x + m - 1) // m * m


def _softplus(x):
    # numerically stable softplus log(1 + exp(x)), computed in f32
    return jnp.maximum(x, 0.0) + jnp.log1p(jnp.exp(-jnp.abs(x)))


# ----------------------------------------------------------------------------
# Kernel: softplus(softplus(x @ W_eff + b1) @ W2 + b2) on one (TB, D) batch tile
# ----------------------------------------------------------------------------
def hsm_kernel(x_ref, w1_ref, b1_ref, w2_ref, b2_ref, out_ref):
    """x_ref: (TB, D) f32/bf16; w1_ref: (D, H1p) bf16; b1_ref: (1, H1p) f32;
    w2_ref: (H1p, N) bf16; b2_ref: (1, N) f32; out_ref: (TB, N) f32."""
    # x is streamed once in its native dtype; cast to bf16 here (VPU, cheap)
    # so the MXU runs native bf16 passes with f32 accumulation.
    xb = x_ref[...].astype(jnp.bfloat16)

    # Fused LGN-DoG projection + cortical block 1.
    h = jnp.dot(xb, w1_ref[...], preferred_element_type=jnp.float32)
    h = _softplus(h + b1_ref[...])                    # (TB, H1p) f32, implicit bcast

    # Cortical block 2 — bf16 MXU inputs, f32 accumulate, f32 epilogue.
    y = jnp.dot(h.astype(jnp.bfloat16), w2_ref[...],
                preferred_element_type=jnp.float32)
    y = _softplus(y + b2_ref[...])                    # (TB, N) f32

    out_ref[...] = y.astype(out_ref.dtype)


# ----------------------------------------------------------------------------
# Parameters (shapes follow HSMModel.__init__ / Antolik 2016 semantics)
# ----------------------------------------------------------------------------
def make_hsm_params(images_size, num_neurons, num_lgn_units=9,
                    hidden_units_fraction=0.2, seed=0):
    B, C, H, W = images_size
    assert C == 1  # TODO(synk): Antolik HSM is grayscale; multi-channel DoG unspecified.
    L = num_lgn_units
    H1 = int(num_neurons * hidden_units_fraction)
    assert H1 >= 1, "hidden_units_fraction * num_neurons rounds to 0"
    N = num_neurons

    key = jax.random.PRNGKey(seed)
    ks = jax.random.split(key, 10)

    # DoG per-LGN-unit parameters (centers, center/surround sigmas & gains)
    cx = jax.random.uniform(ks[0], (1, L), jnp.float32, 0.0, float(W - 1))
    cy = jax.random.uniform(ks[1], (1, L), jnp.float32, 0.0, float(H - 1))
    sc = jax.random.uniform(ks[2], (1, L), jnp.float32, 1.0, 3.0)
    ss = sc * jax.random.uniform(ks[3], (1, L), jnp.float32, 1.5, 3.0)
    ac = jax.random.uniform(ks[4], (1, L), jnp.float32, 0.5, 1.5)
    asur = jax.random.uniform(ks[5], (1, L), jnp.float32, 0.1, 0.5)

    # Cortical dense blocks
    w1 = 0.1 * jax.random.normal(ks[6], (L, H1), jnp.float32)
    b1 = 0.1 * jax.random.normal(ks[7], (1, H1), jnp.float32)
    w2 = 0.1 * jax.random.normal(ks[8], (H1, N), jnp.float32)
    b2 = 0.1 * jax.random.normal(ks[9], (1, N), jnp.float32)

    # Flattened pixel coordinate grids, row-major over (H, W): (D, 1)
    yy, xx = jnp.meshgrid(jnp.arange(H, dtype=jnp.float32),
                          jnp.arange(W, dtype=jnp.float32), indexing="ij")
    xg = xx.reshape(-1, 1)
    yg = yy.reshape(-1, 1)

    return dict(cx=cx, cy=cy, sc=sc, ss=ss, ac=ac, asur=asur,
                w1=w1, b1=b1, w2=w2, b2=b2, xg=xg, yg=yg)


def build_dog_bank(params):
    """Difference-of-Gaussians filter bank, (D, L)."""
    d2 = (params["xg"] - params["cx"]) ** 2 + (params["yg"] - params["cy"]) ** 2
    center = params["ac"] * jnp.exp(-d2 / (2.0 * params["sc"] ** 2))
    surround = params["asur"] * jnp.exp(-d2 / (2.0 * params["ss"] ** 2))
    return center - surround


# ----------------------------------------------------------------------------
# Tile sizing: byte-driven, >=2 grid steps when possible, VMEM-budgeted
# ----------------------------------------------------------------------------
def _vmem_bytes(tb, D, N, H1p, x_itemsize):
    return (2 * tb * D * x_itemsize                       # x tiles (double-buffered)
            + 2 * tb * N * 4                              # out tiles (double-buffered)
            + 2 * (D * H1p * 2 + H1p * N * 2 + (H1p + N) * 4)  # resident weights/biases
            + tb * D * 2                                  # in-kernel bf16 copy of x
            + tb * H1p * 6)                               # h (f32) + bf16 copy


def _pick_tb(B, D, N, H1p, x_itemsize, tb=None):
    if tb is None:
        # ~2 MiB x tile amortizes the ~0.35us fixed per-grid-step overhead.
        tb = _round_up(pl.cdiv(2 << 20, x_itemsize * D), _SUB)
        if B >= 2 * _SUB:
            # keep >= 2 grid steps so both v7x TensorCores get work
            tb = min(tb, _round_up(pl.cdiv(B, 2), _SUB))
        else:
            tb = min(tb, _round_up(max(B, _SUB), _SUB))
    tb = max(_round_up(tb, _SUB), _SUB)
    # shrink until the working set fits the per-generation VMEM budget
    while tb > _SUB and _vmem_bytes(tb, D, N, H1p, x_itemsize) > _VMEM_BUDGET:
        tb = max(_round_up(tb // 2, _SUB), _SUB)
    return tb


# ----------------------------------------------------------------------------
# Wrapper: fold DoG into W_eff, pick tile, call the kernel
# ----------------------------------------------------------------------------
@partial(jax.jit, static_argnames=("num_neurons", "tb"))
def hsm_forward(x_nchw, params, *, num_neurons, tb=None):
    B, C, H, W = x_nchw.shape
    D = C * H * W
    assert C == 1 and params["xg"].shape[0] == H * W
    N = num_neurons
    H1 = params["w1"].shape[1]

    # Fuse DoG bank + first dense weight (tiny (D,L)@(L,H1) op, stays in wrapper).
    w1_eff = build_dog_bank(params) @ params["w1"]                      # (D, H1) f32

    # Pad hidden width to a lane-dense multiple of 128 (exact: padded W2 rows are 0).
    H1p = _round_up(max(H1, 1), 128)
    w1_eff_p = (jnp.zeros((D, H1p), jnp.float32)
                .at[:, :H1].set(w1_eff).astype(jnp.bfloat16))
    b1_p = jnp.zeros((1, H1p), jnp.float32).at[:, :H1].set(params["b1"])
    w2_p = (jnp.zeros((H1p, N), jnp.float32)
            .at[:H1, :].set(params["w2"]).astype(jnp.bfloat16))
    b2_p = params["b2"].astype(jnp.float32)                             # (1, N)

    # Stream x once in its native float dtype (f32 or bf16); no pad copy.
    x_flat = x_nchw.reshape(B, D)
    if x_flat.dtype not in (jnp.dtype(jnp.float32), jnp.dtype(jnp.bfloat16)):
        x_flat = x_flat.astype(jnp.float32)
    x_itemsize = x_flat.dtype.itemsize

    tb = _pick_tb(B, D, N, H1p, x_itemsize, tb)

    # Only the degenerate B < tb case pads rows (at most one small tile);
    # otherwise the ragged final block is handled by Pallas' masked boundary DMA.
    B_in = B
    if B < tb:
        x_flat = jnp.pad(x_flat, ((0, tb - B), (0, 0)))
        B_in = tb

    grid = (pl.cdiv(B_in, tb),)
    vmem_limit = int(min(max(_vmem_bytes(tb, D, N, H1p, x_itemsize) + (4 << 20),
                             32 << 20), _VMEM_LIMIT_CAP))

    out = pl.pallas_call(
        hsm_kernel,
        out_shape=jax.ShapeDtypeStruct((B_in, N), jnp.float32),
        grid=grid,
        in_specs=[
            pl.BlockSpec((tb, D), lambda i: (i, 0)),      # streamed batch tiles
            pl.BlockSpec((D, H1p), lambda i: (0, 0)),     # VMEM-resident fused weight
            pl.BlockSpec((1, H1p), lambda i: (0, 0)),     # resident bias 1
            pl.BlockSpec((H1p, N), lambda i: (0, 0)),     # resident weight 2 (bf16)
            pl.BlockSpec((1, N), lambda i: (0, 0)),       # resident bias 2
        ],
        out_specs=pl.BlockSpec((tb, N), lambda i: (i, 0)),
        compiler_params=pltpu.CompilerParams(
            dimension_semantics=("parallel",),            # shard grid over v7x's 2 TCs
            vmem_limit_bytes=vmem_limit),
    )(x_flat, w1_eff_p, b1_p, w2_p, b2_p)

    return out if B_in == B else out[:B]


# ----------------------------------------------------------------------------
# Pure-JAX references
# ----------------------------------------------------------------------------
def hsm_reference_f32(x_nchw, params):
    """Unfused full-f32 reference matching the original module composition."""
    B, C, H, W = x_nchw.shape
    x = x_nchw.reshape(B, C * H * W).astype(jnp.float32)
    lgn = x @ build_dog_bank(params)
    h = jax.nn.softplus(lgn @ params["w1"] + params["b1"])
    return jax.nn.softplus(h @ params["w2"] + params["b2"])


def hsm_reference_kernelpath(x_nchw, params):
    """Reference matching the kernel's data path (fused bf16 W_eff, bf16 h/W2)."""
    B, C, H, W = x_nchw.shape
    x = x_nchw.reshape(B, C * H * W).astype(jnp.bfloat16).astype(jnp.float32)
    w_eff = (build_dog_bank(params) @ params["w1"]).astype(jnp.bfloat16).astype(jnp.float32)
    h = jax.nn.softplus(x @ w_eff + params["b1"])
    h = h.astype(jnp.bfloat16).astype(jnp.float32)
    w2 = params["w2"].astype(jnp.bfloat16).astype(jnp.float32)
    return jax.nn.softplus(h @ w2 + params["b2"])


if __name__ == "__main__":
    # Small shapes consistent with the module: images_size = (B, C=1, H, W)
    images_size = (2, 1, 16, 16)
    num_neurons = 32
    num_lgn_units = 9
    hidden_units_fraction = 0.2

    params = make_hsm_params(images_size, num_neurons, num_lgn_units,
                             hidden_units_fraction, seed=0)

    # --- small-batch check (B=2 -> single padded tile, one grid step) ---
    x = jax.random.normal(jax.random.PRNGKey(0), images_size, dtype=jnp.float32)
    out = jax.block_until_ready(hsm_forward(x, params, num_neurons=num_neurons))
    assert out.shape == (images_size[0], num_neurons)
    assert jnp.allclose(out, hsm_reference_kernelpath(x, params), rtol=2e-3, atol=2e-3)
    assert jnp.allclose(out, hsm_reference_f32(x, params), rtol=3e-2, atol=3e-2)

    # --- multi-step grid check: 2 grid steps, ragged final block, resident weights ---
    B2 = 300
    x2 = jax.random.normal(jax.random.PRNGKey(1), (B2, 1, 16, 16), dtype=jnp.float32)
    out2 = jax.block_until_ready(hsm_forward(x2, params, num_neurons=num_neurons))
    assert out2.shape == (B2, num_neurons)
    assert jnp.allclose(out2, hsm_reference_kernelpath(x2, params), rtol=2e-3, atol=2e-3)
    assert jnp.allclose(out2, hsm_reference_f32(x2, params), rtol=3e-2, atol=3e-2)

    print("KERNEL_OK")
</pallas_src>

<mosaic_0001>
module attributes {stable_mosaic.version = 11 : i64} {
  func.func @hsm_kernel(%arg0: i32, %arg1: memref<16x256xf32, #tpu.memory_space<vmem>>, %arg2: memref<256x128xbf16, #tpu.memory_space<vmem>>, %arg3: memref<1x128xf32, #tpu.memory_space<vmem>>, %arg4: memref<128x32xbf16, #tpu.memory_space<vmem>>, %arg5: memref<1x32xf32, #tpu.memory_space<vmem>>, %arg6: memref<16x32xf32, #tpu.memory_space<vmem>>) attributes {dimension_semantics = [#tpu.dimension_semantics<parallel>], iteration_bounds = array<i64: 1>, scalar_prefetch = 0 : i64, scratch_operands = 0 : i64, tpu.core_type = #tpu.core_type<tc>, window_params = [{transform_indices = @transform_0, window_bounds = array<i64: 16, 256>}, {pipeline_mode = #tpu.pipeline_mode<synchronous>, transform_indices = @transform_1, window_bounds = array<i64: 256, 128>}, {pipeline_mode = #tpu.pipeline_mode<synchronous>, transform_indices = @transform_2, window_bounds = array<i64: 1, 128>}, {pipeline_mode = #tpu.pipeline_mode<synchronous>, transform_indices = @transform_3, window_bounds = array<i64: 128, 32>}, {pipeline_mode = #tpu.pipeline_mode<synchronous>, transform_indices = @transform_4, window_bounds = array<i64: 1, 32>}, {transform_indices = @transform_5, window_bounds = array<i64: 16, 32>}]} {
    %c0 = arith.constant 0 : index
    %c0_0 = arith.constant 0 : index
    %0 = vector.load %arg1[%c0, %c0_0] : memref<16x256xf32, #tpu.memory_space<vmem>>, vector<16x256xf32>
    %1 = arith.truncf %0 : vector<16x256xf32> to vector<16x256xbf16>
    %c0_1 = arith.constant 0 : index
    %c0_2 = arith.constant 0 : index
    %2 = vector.load %arg2[%c0_1, %c0_2] : memref<256x128xbf16, #tpu.memory_space<vmem>>, vector<256x128xbf16>
    %cst = arith.constant dense<0.000000e+00> : vector<16x128xf32>
    %3 = tpu.matmul %1, %2, %cst {dimension_numbers = #tpu.dot_dimension_numbers<[1], [0], [0], [1], [0, 0, 1, 1], [], []>} : vector<16x256xbf16>, vector<256x128xbf16>, vector<16x128xf32> -> vector<16x128xf32>
    %c0_3 = arith.constant 0 : index
    %c0_4 = arith.constant 0 : index
    %4 = vector.load %arg3[%c0_3, %c0_4] : memref<1x128xf32, #tpu.memory_space<vmem>>, vector<1x128xf32>
    %5 = vector.broadcast %4 : vector<1x128xf32> to vector<16x128xf32>
    %6 = arith.addf %3, %5 : vector<16x128xf32>
    %cst_5 = arith.constant 0.000000e+00 : f32
    %7 = vector.broadcast %cst_5 : f32 to vector<16x128xf32>
    %8 = arith.maximumf %6, %7 : vector<16x128xf32>
    %9 = math.absf %6 : vector<16x128xf32>
    %cst_6 = arith.constant 0.000000e+00 : f32
    %10 = vector.broadcast %cst_6 : f32 to vector<16x128xf32>
    %11 = arith.subf %10, %9 : vector<16x128xf32>
    %12 = math.exp %11 : vector<16x128xf32>
    %13 = math.log1p %12 : vector<16x128xf32>
    %14 = arith.addf %8, %13 : vector<16x128xf32>
    %15 = arith.truncf %14 : vector<16x128xf32> to vector<16x128xbf16>
    %c0_7 = arith.constant 0 : index
    %c0_8 = arith.constant 0 : index
    %16 = vector.load %arg4[%c0_7, %c0_8] : memref<128x32xbf16, #tpu.memory_space<vmem>>, vector<128x32xbf16>
    %cst_9 = arith.constant dense<0.000000e+00> : vector<16x32xf32>
    %17 = tpu.matmul %15, %16, %cst_9 {dimension_numbers = #tpu.dot_dimension_numbers<[1], [0], [0], [1], [0, 0, 1, 1], [], []>} : vector<16x128xbf16>, vector<128x32xbf16>, vector<16x32xf32> -> vector<16x32xf32>
    %c0_10 = arith.constant 0 : index
    %c0_11 = arith.constant 0 : index
    %18 = vector.load %arg5[%c0_10, %c0_11] : memref<1x32xf32, #tpu.memory_space<vmem>>, vector<1x32xf32>
    %19 = vector.broadcast %18 : vector<1x32xf32> to vector<16x32xf32>
    %20 = arith.addf %17, %19 : vector<16x32xf32>
    %cst_12 = arith.constant 0.000000e+00 : f32
    %21 = vector.broadcast %cst_12 : f32 to vector<16x32xf32>
    %22 = arith.maximumf %20, %21 : vector<16x32xf32>
    %23 = math.absf %20 : vector<16x32xf32>
    %cst_13 = arith.constant 0.000000e+00 : f32
    %24 = vector.broadcast %cst_13 : f32 to vector<16x32xf32>
    %25 = arith.subf %24, %23 : vector<16x32xf32>
    %26 = math.exp %25 : vector<16x32xf32>
    %27 = math.log1p %26 : vector<16x32xf32>
    %28 = arith.addf %22, %27 : vector<16x32xf32>
    %c0_14 = arith.constant 0 : index
    %c0_15 = arith.constant 0 : index
    %29 = vector.load %arg6[%c0_14, %c0_15] : memref<16x32xf32, #tpu.memory_space<vmem>>, vector<16x32xf32>
    tpu.vector_store %arg6[%c0_14, %c0_15], %28 {strides = array<i32>} : memref<16x32xf32, #tpu.memory_space<vmem>>, vector<16x32xf32>,
    return
  }
  func.func @transform_0(%arg0: i32) -> (i32, i32) {
    %c0_i32 = arith.constant 0 : i32
    %c0_i32_0 = arith.constant 0 : i32
    return %arg0, %c0_i32 : i32, i32
  }
  func.func @transform_1(%arg0: i32) -> (i32, i32) {
    %c0_i32 = arith.constant 0 : i32
    %c0_i32_0 = arith.constant 0 : i32
    %c0_i32_1 = arith.constant 0 : i32
    return %c0_i32, %c0_i32_0 : i32, i32
  }
  func.func @transform_2(%arg0: i32) -> (i32, i32) {
    %c0_i32 = arith.constant 0 : i32
    %c0_i32_0 = arith.constant 0 : i32
    %c0_i32_1 = arith.constant 0 : i32
    return %c0_i32, %c0_i32_0 : i32, i32
  }
  func.func @transform_3(%arg0: i32) -> (i32, i32) {
    %c0_i32 = arith.constant 0 : i32
    %c0_i32_0 = arith.constant 0 : i32
    %c0_i32_1 = arith.constant 0 : i32
    return %c0_i32, %c0_i32_0 : i32, i32
  }
  func.func @transform_4(%arg0: i32) -> (i32, i32) {
    %c0_i32 = arith.constant 0 : i32
    %c0_i32_0 = arith.constant 0 : i32
    %c0_i32_1 = arith.constant 0 : i32
    return %c0_i32, %c0_i32_0 : i32, i32
  }
  func.func @transform_5(%arg0: i32) -> (i32, i32) {
    %c0_i32 = arith.constant 0 : i32
    %c0_i32_0 = arith.constant 0 : i32
    return %arg0, %c0_i32 : i32, i32
  }
}

</mosaic_0001>

<llo_original>
// kernel: hsm_forward.1
$region0: #{hsm_forward.1}
  #allocation0 [shape = 'u32[]', space=smem, size = 0x4, offset = 0x4, fixed_abs, tag = 'smem constant byte address 0x4 - core index']
  #allocation1 [shape = 'u32[144,128]{1,0:T(1,128)}', space=vmem, size = 0x12000, scoped, tag = 'internal scratch']
  %s0 = inlined_call_operand.vmem [shape: f32[16,256], index: 0, kind: input, shape index: {}]
  %s1 = inlined_call_operand.vmem [shape: bf16[256,128], index: 1, kind: input, shape index: {}]
  %s2 = inlined_call_operand.vmem [shape: f32[1,128], index: 2, kind: input, shape index: {}]
  %s3 = inlined_call_operand.vmem [shape: bf16[128,32], index: 3, kind: input, shape index: {}]
  %s4 = inlined_call_operand.vmem [shape: f32[1,32], index: 4, kind: input, shape index: {}]
  %s5 = inlined_call_operand.vmem [shape: f32[16,32], index: 5, kind: output, shape index: {}]
  %s6 = sld [smem:[#allocation0]]
  $region30: #{hsm_forward.1} parent=0
    _
  %s8 = ssub.s32 1, %s6
  %s9 = scalar_select 0, %s8, %s6
  // Predicated region
  $region2: #{hsm_forward.1} parent=0 // pred_check
    _
  $region3: #{hsm_forward.1} parent=0 // pred_check_branch
    %11 = sbr.rel (0) target = $region5
  $region4: #{hsm_forward.1} parent=0 // pred_region
    _
  $region5: #{hsm_forward.1} parent=0 // pred_fallthru
    _
  // Predicated region
  $region6: #{hsm_forward.1} parent=0 // pred_check
    _
  $region7: #{hsm_forward.1} parent=0 // pred_check_branch
    %13 = sbr.rel (0) target = $region9
  $region8: #{hsm_forward.1} parent=0 // pred_region
    _
  $region9: #{hsm_forward.1} parent=0 // pred_fallthru
    _
  // Predicated region
  $region10: #{hsm_forward.1} parent=0 // pred_check
    _
  $region11: #{hsm_forward.1} parent=0 // pred_check_branch
    %15 = sbr.rel (0) target = $region13
  $region12: #{hsm_forward.1} parent=0 // pred_region
    _
  $region13: #{hsm_forward.1} parent=0 // pred_fallthru
    _
  // Predicated region
  $region14: #{hsm_forward.1} parent=0 // pred_check
    _
  $region15: #{hsm_forward.1} parent=0 // pred_check_branch
    %17 = sbr.rel (0) target = $region17
  $region16: #{hsm_forward.1} parent=0 // pred_region
    _
  $region17: #{hsm_forward.1} parent=0 // pred_fallthru
    _
  // Predicated region
  $region18: #{hsm_forward.1} parent=0 // pred_check
    _
  $region19: #{hsm_forward.1} parent=0 // pred_check_branch
    %19 = sbr.rel (0) target = $region21
  $region20: #{hsm_forward.1} parent=0 // pred_region
    _
  $region21: #{hsm_forward.1} parent=0 // pred_fallthru
    _
  %v21 = vld [vmem:[%s0] sm:$0xff]
  %v22 = vld [vmem:[%s0 + $0x8] sm:$0xff]
  %v23 = vld [vmem:[%s0 + $0x10] sm:$0xff]
  %v24 = vld [vmem:[%s0 + $0x18] sm:$0xff]
  %v25 = vpack.c.bf16 %v23, %v21
  %v26 = vpack.c.bf16 %v24, %v22
  %v27 = vld [vmem:[%s1] sm:$0xf]
  %v28 = vld [vmem:[%s1 + $0x4] sm:$0xf]
  %v29 = vld [vmem:[%s1 + $0x8] sm:$0xf]
  %v30 = vld [vmem:[%s1 + $0xc] sm:$0xf]
  %v31 = vld [vmem:[%s1 + $0x10] sm:$0xf]
  %v32 = vld [vmem:[%s1 + $0x14] sm:$0xf]
  %v33 = vld [vmem:[%s1 + $0x18] sm:$0xf]
  %v34 = vld [vmem:[%s1 + $0x1c] sm:$0xf]
  %v35 = vld [vmem:[%s1 + $0x20] sm:$0xf]
  %v36 = vld [vmem:[%s1 + $0x24] sm:$0xf]
  %v37 = vld [vmem:[%s1 + $0x28] sm:$0xf]
  %v38 = vld [vmem:[%s1 + $0x2c] sm:$0xf]
  %v39 = vld [vmem:[%s1 + $0x30] sm:$0xf]
  %v40 = vld [vmem:[%s1 + $0x34] sm:$0xf]
  %v41 = vld [vmem:[%s1 + $0x38] sm:$0xf]
  %v42 = vld [vmem:[%s1 + $0x3c] sm:$0xf]
  %v43 = vld [vmem:[%s1 + $0x40] sm:$0xf]
  %v44 = vld [vmem:[%s1 + $0x44] sm:$0xf]
  %v45 = vld [vmem:[%s1 + $0x48] sm:$0xf]
  %v46 = vld [vmem:[%s1 + $0x4c] sm:$0xf]
  %v47 = vld [vmem:[%s1 + $0x50] sm:$0xf]
  %v48 = vld [vmem:[%s1 + $0x54] sm:$0xf]
  %v49 = vld [vmem:[%s1 + $0x58] sm:$0xf]
  %v50 = vld [vmem:[%s1 + $0x5c] sm:$0xf]
  %v51 = vld [vmem:[%s1 + $0x60] sm:$0xf]
  %v52 = vld [vmem:[%s1 + $0x64] sm:$0xf]
  %v53 = vld [vmem:[%s1 + $0x68] sm:$0xf]
  %v54 = vld [vmem:[%s1 + $0x6c] sm:$0xf]
  %v55 = vld [vmem:[%s1 + $0x70] sm:$0xf]
  %v56 = vld [vmem:[%s1 + $0x74] sm:$0xf]
  %v57 = vld [vmem:[%s1 + $0x78] sm:$0xf]
  %v58 = vld [vmem:[%s1 + $0x7c] sm:$0xf]
  %v59 = vld [vmem:[%s2] sm:$0x1]
  %v61 = vlaneseq
  %v62 = vshrl.u32 %v61, 7
  %v63 = vsub.s32 0, %v62
  %v64 = vrot.slane %v59, %v63
  %v98 = vunpack.c.l.b16 %v27
  %v99 = vunpack.c.l.b16 %v28
  %v100 = vunpack.c.l.b16 %v29
  %v101 = vunpack.c.l.b16 %v30
  %v102 = vunpack.c.l.b16 %v31
  %v103 = vunpack.c.l.b16 %v32
  %v104 = vunpack.c.l.b16 %v33
  %v105 = vunpack.c.l.b16 %v34
  %v106 = vunpack.c.l.b16 %v35
  %v107 = vunpack.c.l.b16 %v36
  %v108 = vunpack.c.l.b16 %v37
  %v109 = vunpack.c.l.b16 %v38
  %v110 = vunpack.c.l.b16 %v39
  %v111 = vunpack.c.l.b16 %v40
  %v112 = vunpack.c.l.b16 %v41
  %v113 = vunpack.c.l.b16 %v42
  %v114 = vunpack.c.l.b16 %v43
  %v115 = vunpack.c.l.b16 %v44
  %v116 = vunpack.c.l.b16 %v45
  %v117 = vunpack.c.l.b16 %v46
  %v118 = vunpack.c.l.b16 %v47
  %v119 = vunpack.c.l.b16 %v48
  %v120 = vunpack.c.l.b16 %v49
  %v121 = vunpack.c.l.b16 %v50
  %v122 = vunpack.c.l.b16 %v51
  %v123 = vunpack.c.l.b16 %v52
  %v124 = vunpack.c.l.b16 %v53
  %v125 = vunpack.c.l.b16 %v54
  %v126 = vunpack.c.l.b16 %v55
  %v127 = vunpack.c.l.b16 %v56
  %v128 = vunpack.c.l.b16 %v57
  %v129 = vunpack.c.l.b16 %v58
  %v130 = vpack.c.b16 %v99, %v98
  %v131 = vpack.c.b16 %v101, %v100
  %v132 = vpack.c.b16 %v103, %v102
  %v133 = vpack.c.b16 %v105, %v104
  %v134 = vpack.c.b16 %v107, %v106
  %v135 = vpack.c.b16 %v109, %v108
  %v136 = vpack.c.b16 %v111, %v110
  %v137 = vpack.c.b16 %v113, %v112
  %v138 = vpack.c.b16 %v115, %v114
  %v139 = vpack.c.b16 %v117, %v116
  %v140 = vpack.c.b16 %v119, %v118
  %v141 = vpack.c.b16 %v121, %v120
  %v142 = vpack.c.b16 %v123, %v122
  %v143 = vpack.c.b16 %v125, %v124
  %v144 = vpack.c.b16 %v127, %v126
  %v145 = vpack.c.b16 %v129, %v128
  %162 = vmatprep.subr.bf16.mxu0 0
  %163 = vmatpush1.bf16.msra.mxu0 %v130
  %164 = vmatprep.subr.bf16.mxu0 0
  %165 = vmatpush1.bf16.msra.mxu0 %v131
  %166 = vmatprep.subr.bf16.mxu0 0
  %167 = vmatpush1.bf16.msra.mxu0 %v132
  %168 = vmatprep.subr.bf16.mxu0 0
  %169 = vmatpush1.bf16.msra.mxu0 %v133
  %170 = vmatprep.subr.bf16.mxu0 0
  %171 = vmatpush1.bf16.msra.mxu0 %v134
  %172 = vmatprep.subr.bf16.mxu0 0
  %173 = vmatpush1.bf16.msra.mxu0 %v135
  %174 = vmatprep.subr.bf16.mxu0 0
  %175 = vmatpush1.bf16.msra.mxu0 %v136
  %176 = vmatprep.subr.bf16.mxu0 0
  %177 = vmatpush1.bf16.msra.mxu0 %v137
  %178 = vmatprep.subr.bf16.mxu0 0
  %179 = vmatpush1.bf16.msra.mxu0 %v138
  %180 = vmatprep.subr.bf16.mxu0 0
  %181 = vmatpush1.bf16.msra.mxu0 %v139
  %182 = vmatprep.subr.bf16.mxu0 0
  %183 = vmatpush1.bf16.msra.mxu0 %v140
  %184 = vmatprep.subr.bf16.mxu0 0
  %185 = vmatpush1.bf16.msra.mxu0 %v141
  %186 = vmatprep.subr.bf16.mxu0 0
  %187 = vmatpush1.bf16.msra.mxu0 %v142
  %188 = vmatprep.subr.bf16.mxu0 0
  %189 = vmatpush1.bf16.msra.mxu0 %v143
  %190 = vmatprep.subr.bf16.mxu0 0
  %191 = vmatpush1.bf16.msra.mxu0 %v144
  %192 = vmatprep.subr.bf16.mxu0 0
  %193 = vmatpush1.bf16.msra.mxu0 %v145
  %194 = vmatprep.mubr.bf16.mxu0 %v26
  %195 = vmatmul.mubr.bf16.gmra.mrb[0].mxu0 %v25
  %v196 = vpop.f32.mrb[0].mxu0
  %v197 = vadd.f32 %v64, %v196
  %v198 = vpop.f32.mrb[0].mxu0
  %v199 = vpop.f32.mrb[0].mxu0
  %v200 = vadd.f32 %v64, %v199
  %v201 = vpop.f32.mrb[0].mxu0
  %202 = vdwg.mxu0
  %v203 = vmax.f32 %v197, 0.0
  %v204 = vmax.f32 %v200, 0.0
  %v205 = vand.u32 2147483647, %v197
  %v206 = vand.u32 2147483647, %v200
  %v207 = vsub.f32 0.0, %v205
  %v208 = vsub.f32 0.0, %v206
  %v209 = vmul.f32 %v207, 1.442695
  %v210 = vpow.pop %v209
  %v211 = vmul.f32 %v208, 1.442695
  %v212 = vpow.pop %v211
  %v213 = vadd.f32 %v210, 1.0
  %v214 = vlog2.pop %v213
  %v215 = vmul.f32 %v214, 0.6931472
  %v216 = vmul.f32 -0.5, %v210
  %v217 = vadd.f32 %v216, 1.0
  %v218 = vmul.f32 %v217, %v210
  %v219 = vand.u32 2147483647, %v210
  %vm220 = vcmp.lt.f32.partialorder %v219, 0.0004427343
  %v221 = vsel %vm220, %v218, %v215
  %v222 = vadd.f32 %v212, 1.0
  %v223 = vlog2.pop %v222
  %v224 = vmul.f32 %v223, 0.6931472
  %v225 = vmul.f32 -0.5, %v212
  %v226 = vadd.f32 %v225, 1.0
  %v227 = vmul.f32 %v226, %v212
  %v228 = vand.u32 2147483647, %v212
  %vm229 = vcmp.lt.f32.partialorder %v228, 0.0004427343
  %v230 = vsel %vm229, %v227, %v224
  %v231 = vadd.f32 %v203, %v221
  %v232 = vadd.f32 %v204, %v230
  %v233 = vpack.c.bf16 %v232, %v231
  %v234 = vld [vmem:[%s3] sm:$0xf]
  %v235 = vld [vmem:[%s3 + $0x4] sm:$0xf]
  %v236 = vld [vmem:[%s3 + $0x8] sm:$0xf]
  %v237 = vld [vmem:[%s3 + $0xc] sm:$0xf]
  %v238 = vld [vmem:[%s3 + $0x10] sm:$0xf]
  %v239 = vld [vmem:[%s3 + $0x14] sm:$0xf]
  %v240 = vld [vmem:[%s3 + $0x18] sm:$0xf]
  %v241 = vld [vmem:[%s3 + $0x1c] sm:$0xf]
  %v242 = vld [vmem:[%s3 + $0x20] sm:$0xf]
  %v243 = vld [vmem:[%s3 + $0x24] sm:$0xf]
  %v244 = vld [vmem:[%s3 + $0x28] sm:$0xf]
  %v245 = vld [vmem:[%s3 + $0x2c] sm:$0xf]
  %v246 = vld [vmem:[%s3 + $0x30] sm:$0xf]
  %v247 = vld [vmem:[%s3 + $0x34] sm:$0xf]
  %v248 = vld [vmem:[%s3 + $0x38] sm:$0xf]
  %v249 = vld [vmem:[%s3 + $0x3c] sm:$0xf]
  %v250 = vld [vmem:[%s4] sm:$0x1]
  %v252 = vlaneseq
  %v253 = vshrl.u32 %v252, 7
  %v254 = vsub.s32 0, %v253
  %v255 = vrot.slane %v250, %v254
  %v273 = vunpack.c.l.b16 %v234
  %v274 = vunpack.c.l.b16 %v235
  %v275 = vunpack.c.l.b16 %v236
  %v276 = vunpack.c.l.b16 %v237
  %v277 = vunpack.c.l.b16 %v238
  %v278 = vunpack.c.l.b16 %v239
  %v279 = vunpack.c.l.b16 %v240
  %v280 = vunpack.c.l.b16 %v241
  %v281 = vunpack.c.l.b16 %v242
  %v282 = vunpack.c.l.b16 %v243
  %v283 = vunpack.c.l.b16 %v244
  %v284 = vunpack.c.l.b16 %v245
  %v285 = vunpack.c.l.b16 %v246
  %v286 = vunpack.c.l.b16 %v247
  %v287 = vunpack.c.l.b16 %v248
  %v288 = vunpack.c.l.b16 %v249
  %v289 = vpack.c.b16 %v274, %v273
  %v290 = vpack.c.b16 %v276, %v275
  %v291 = vpack.c.b16 %v278, %v277
  %v292 = vpack.c.b16 %v280, %v279
  %v293 = vpack.c.b16 %v282, %v281
  %v294 = vpack.c.b16 %v284, %v283
  %v295 = vpack.c.b16 %v286, %v285
  %v296 = vpack.c.b16 %v288, %v287
  %305 = vmatprep.subr.bf16.mxu0 0
  %306 = vmatpush1.bf16.msra.mxu0 %v289
  %307 = vmatprep.subr.bf16.mxu0 0
  %308 = vmatpush1.bf16.msra.mxu0 %v290
  %309 = vmatprep.subr.bf16.mxu0 0
  %310 = vmatpush1.bf16.msra.mxu0 %v291
  %311 = vmatprep.subr.bf16.mxu0 0
  %312 = vmatpush1.bf16.msra.mxu0 %v292
  %313 = vmatprep.subr.bf16.mxu0 0
  %314 = vmatpush1.bf16.msra.mxu0 %v293
  %315 = vmatprep.subr.bf16.mxu0 0
  %316 = vmatpush1.bf16.msra.mxu0 %v294
  %317 = vmatprep.subr.bf16.mxu0 0
  %318 = vmatpush1.bf16.msra.mxu0 %v295
  %319 = vmatprep.subr.bf16.mxu0 0
  %320 = vmatpush1.bf16.msra.mxu0 %v296
  %321 = vmatprep.subr.bf16.mxu0 0
  %322 = vmatpush1.bf16.msra.mxu0 0
  %323 = vmatprep.subr.bf16.mxu0 0
  %324 = vmatpush1.bf16.msra.mxu0 0
  %325 = vmatprep.subr.bf16.mxu0 0
  %326 = vmatpush1.bf16.msra.mxu0 0
  %327 = vmatprep.subr.bf16.mxu0 0
  %328 = vmatpush1.bf16.msra.mxu0 0
  %329 = vmatprep.subr.bf16.mxu0 0
  %330 = vmatpush1.bf16.msra.mxu0 0
  %331 = vmatprep.subr.bf16.mxu0 0
  %332 = vmatpush1.bf16.msra.mxu0 0
  %333 = vmatprep.subr.bf16.mxu0 0
  %334 = vmatpush1.bf16.msra.mxu0 0
  %335 = vmatprep.subr.bf16.mxu0 0
  %336 = vmatpush1.bf16.msra.mxu0 0
  %337 = vmatprep.mubr.bf16.mxu0 0
  %338 = vmatmul.mubr.bf16.gmra.mrb[0].mxu0 %v233
  %v339 = vpop.f32.mrb[0].mxu0
  %v340 = vadd.f32 %v255, %v339
  %v341 = vpop.f32.mrb[0].mxu0
  %v342 = vpop.f32.mrb[0].mxu0
  %v343 = vadd.f32 %v255, %v342
  %v344 = vpop.f32.mrb[0].mxu0
  %345 = vdwg.mxu0
  %v346 = vmax.f32 %v340, 0.0
  %v347 = vmax.f32 %v343, 0.0
  %v348 = vand.u32 2147483647, %v340
  %v349 = vand.u32 2147483647, %v343
  %v350 = vsub.f32 0.0, %v348
  %v351 = vsub.f32 0.0, %v349
  %v352 = vmul.f32 %v350, 1.442695
  %v353 = vpow.pop %v352
  %v354 = vmul.f32 %v351, 1.442695
  %v355 = vpow.pop %v354
  %v356 = vadd.f32 %v353, 1.0
  %v357 = vlog2.pop %v356
  %v358 = vmul.f32 %v357, 0.6931472
  %v359 = vmul.f32 -0.5, %v353
  %v360 = vadd.f32 %v359, 1.0
  %v361 = vmul.f32 %v360, %v353
  %v362 = vand.u32 2147483647, %v353
  %vm363 = vcmp.lt.f32.partialorder %v362, 0.0004427343
  %v364 = vsel %vm363, %v361, %v358
  %v365 = vadd.f32 %v355, 1.0
  %v366 = vlog2.pop %v365
  %v367 = vmul.f32 %v366, 0.6931472
  %v368 = vmul.f32 -0.5, %v355
  %v369 = vadd.f32 %v368, 1.0
  %v370 = vmul.f32 %v369, %v355
  %v371 = vand.u32 2147483647, %v355
  %vm372 = vcmp.lt.f32.partialorder %v371, 0.0004427343
  %v373 = vsel %vm372, %v370, %v367
  %v374 = vadd.f32 %v346, %v364
  %v375 = vadd.f32 %v347, %v373
  %vm376 = vcmask 261120
  %377 = vst.msk [vmem:[%s5] sm:$0xff] %vm376, %v374
  %378 = vst.msk [vmem:[%s5 + $0x8] sm:$0xff] %vm376, %v375
  // Predicated region
  $region22: #{hsm_forward.1} parent=0 // pred_check
    _
  $region23: #{hsm_forward.1} parent=0 // pred_check_branch
    %380 = sbr.rel (0) target = $region25
  $region24: #{hsm_forward.1} parent=0 // pred_region
    _
  $region25: #{hsm_forward.1} parent=0 // pred_fallthru
    _
  // Predicated region
  $region26: #{hsm_forward.1} parent=0 // pred_check
    _
  $region27: #{hsm_forward.1} parent=0 // pred_check_branch
    %382 = sbr.rel (0) target = $region29
  $region28: #{hsm_forward.1} parent=0 // pred_region
    _
  $region29: #{hsm_forward.1} parent=0 // pred_fallthru
    _

</llo_original>
